<compile_context>
chip_gen: v6e
topology: v6e:2x2x1
jax: 0.10.0
libtpu: 0.0.40
codegen_flags: <defaults>
</compile_context>

<pallas_src>
import functools

import jax
import jax.numpy as jnp
from jax import lax
from jax.experimental import pallas as pl
from jax.experimental.pallas import tpu as pltpu

_LANE = 128


def _round_up(n, m):
    return ((n + m - 1) // m) * m


def _tpu_info():
    """(vmem_capacity_bytes, tensorcores_per_chip), conservative fallbacks."""
    vmem = 64 << 20          # smallest per-TC VMEM across v5e/v6e/v7x
    cores = 1
    try:
        info = pltpu.get_tpu_info()
        vmem = int(getattr(info, "vmem_capacity_bytes", vmem)) or vmem
        for name in ("num_tensorcores", "tensorcores_per_chip",
                     "num_cores", "core_count"):
            v = getattr(info, name, None)
            if v:
                cores = int(v)
                break
    except Exception:
        pass
    return vmem, cores


def _pick_batch_tile(batch, d, h_pad, mm_itemsize, x_itemsize, out_itemsize,
                     vmem_budget_bytes, *, max_tile=8192):
    """Largest batch tile keeping streamed tiles + resident weights + f32
    intermediates under the VMEM budget (15% headroom), rounded to the matmul
    dtype's sublane packing (8 f32 / 16 bf16 / 32 int8)."""
    # Weights are requested single-buffered (pl.Buffered(1)).
    weight_bytes = 2 * h_pad * d * mm_itemsize + (h_pad + d) * 4
    # Per batch-row: 2x streamed x tile, 2x streamed out tile, f32 h, narrow
    # copy of h for the second matmul (if mm dtype < f32), f32 y.
    per_row = (2 * d * x_itemsize + 2 * d * out_itemsize
               + h_pad * 4
               + (h_pad * mm_itemsize if mm_itemsize < 4 else 0)
               + d * 4)
    avail = int(vmem_budget_bytes * 0.85) - weight_bytes
    if avail <= per_row * 8:
        # TODO(synk): tile the feature/hidden dims with an accumulator (P3)
        # when weights alone exceed the VMEM budget (not needed for this
        # module's hidden_dim=4 autoencoder).
        raise ValueError("Autoencoder weights do not fit the VMEM budget.")
    tb = min(max_tile, avail // per_row)
    if batch <= tb:
        return batch                        # single block == full batch (legal)
    pack = max(8, 8 * (4 // max(mm_itemsize, 1)))
    return max(pack, (tb // pack) * pack)


def _autoencoder_kernel(x_ref, w1_ref, b1_ref, w2_ref, b2_ref, out_ref, *,
                        mm_dtype):
    # x:  (TB, D)  input dtype        w1: (Hp, D)  mm_dtype (PyTorch (out,in))
    # b1: (1, Hp)  f32                w2: (D, Hp)  mm_dtype (PyTorch (out,in))
    # b2: (1, D)   f32                out: (TB, D) out dtype
    x = x_ref[...].astype(mm_dtype)
    # Encoder: contract in-features (axis 1 of both operands) -> (TB, Hp).
    h = lax.dot_general(x, w1_ref[...],
                        dimension_numbers=(((1,), (1,)), ((), ())),
                        preferred_element_type=jnp.float32)
    h = jnp.maximum(h + b1_ref[...], 0.0)            # bias + ReLU in f32 (VPU)
    # Decoder: (TB, Hp) contracted with (D, Hp) on axis 1 -> (TB, D).
    y = lax.dot_general(h.astype(mm_dtype), w2_ref[...],
                        dimension_numbers=(((1,), (1,)), ((), ())),
                        preferred_element_type=jnp.float32)
    out_ref[...] = (y + b2_ref[...]).astype(out_ref.dtype)


def prepare_params(w1, b1, w2, b2, mm_dtype=jnp.float32):
    """One-time (outside the hot path) prep of PyTorch-layout params.  Only
    the hidden dim is zero-padded to a lane multiple; the streamed feature
    dim D stays unpadded so x/out HBM traffic is not inflated."""
    H, D = w1.shape
    Hp = _round_up(H, _LANE)
    w1p = jnp.zeros((Hp, D), mm_dtype).at[:H, :].set(w1.astype(mm_dtype))
    b1p = jnp.zeros((1, Hp), jnp.float32).at[0, :H].set(b1.astype(jnp.float32))
    w2p = jnp.zeros((D, Hp), mm_dtype).at[:, :H].set(w2.astype(mm_dtype))
    b2p = b2.astype(jnp.float32).reshape(1, D)
    return dict(w1=w1p, b1=b1p, w2=w2p, b2=b2p,
                D=D, H=H, Hp=Hp, mm_dtype=mm_dtype)


def _build_call(B, D, Hp, tb, mm_dtype, x_dtype, out_dtype, *,
                buffered_weights, dimension_semantics, vmem_limit_bytes):
    w_kw = {}
    if buffered_weights and hasattr(pl, "Buffered"):
        w_kw = dict(pipeline_mode=pl.Buffered(1))     # constant blocks: 1 copy

    in_specs = [
        pl.BlockSpec((tb, D), lambda i: (i, 0)),           # x: streamed
        pl.BlockSpec((Hp, D), lambda i: (0, 0), **w_kw),   # w1: VMEM-resident
        pl.BlockSpec((1, Hp), lambda i: (0, 0), **w_kw),   # b1: VMEM-resident
        pl.BlockSpec((D, Hp), lambda i: (0, 0), **w_kw),   # w2: VMEM-resident
        pl.BlockSpec((1, D), lambda i: (0, 0), **w_kw),    # b2: VMEM-resident
    ]

    mm_item = jnp.dtype(mm_dtype).itemsize
    flops = 2 * 2 * B * D * Hp
    bytes_accessed = (B * D * jnp.dtype(x_dtype).itemsize       # x read
                      + 2 * Hp * D * mm_item                    # w1 + w2 read
                      + (Hp + D) * 4                            # biases read
                      + B * D * jnp.dtype(out_dtype).itemsize)  # out write

    return pl.pallas_call(
        functools.partial(_autoencoder_kernel, mm_dtype=mm_dtype),
        out_shape=jax.ShapeDtypeStruct((B, D), out_dtype),
        grid=(pl.cdiv(B, tb),),
        in_specs=in_specs,
        out_specs=pl.BlockSpec((tb, D), lambda i: (i, 0)),
        compiler_params=pltpu.CompilerParams(
            dimension_semantics=dimension_semantics,
            vmem_limit_bytes=int(vmem_limit_bytes)),
        cost_estimate=pl.CostEstimate(flops=flops, transcendentals=0,
                                      bytes_accessed=bytes_accessed),
    )


def autoencoder_forward(x, params, *, out_dtype=jnp.float32, max_batch_tile=8192):
    """Pallas forward: (B, D) -> (B, D) reconstruction (PyTorch semantics)."""
    B, D = x.shape
    assert D == params["D"]
    Hp = params["Hp"]
    mm_dtype = params["mm_dtype"]

    vmem_cap, n_cores = _tpu_info()
    vmem_budget = int(vmem_cap * 0.70)   # ~90 MiB v5e/v6e, ~45 MiB v7x

    tb = _pick_batch_tile(B, D, Hp,
                          jnp.dtype(mm_dtype).itemsize,
                          jnp.dtype(x.dtype).itemsize,
                          jnp.dtype(out_dtype).itemsize,
                          vmem_budget, max_tile=max_batch_tile)

    if n_cores > 1 and hasattr(pltpu, "CORE_PARALLEL"):
        preferred_sem = (pltpu.CORE_PARALLEL,)        # v7x: shard batch on 2 TCs
    else:
        preferred_sem = ("parallel",)

    attempts = [dict(buffered=True, sem=preferred_sem)]
    if preferred_sem != ("parallel",):
        attempts.append(dict(buffered=True, sem=("parallel",)))
    attempts.append(dict(buffered=False, sem=("parallel",)))

    args = (x, params["w1"], params["b1"], params["w2"], params["b2"])
    last_err = None
    for a in attempts:
        try:
            call = _build_call(B, D, Hp, tb, mm_dtype, x.dtype, out_dtype,
                               buffered_weights=a["buffered"],
                               dimension_semantics=a["sem"],
                               vmem_limit_bytes=vmem_budget)
            return call(*args)
        except Exception as e:   # fall back to a more conservative config
            last_err = e
    raise last_err


def _reference_forward(x, w1, b1, w2, b2, mm_dtype=jnp.float32):
    """Pure-JAX reference matching PyTorch semantics (and the mm dtype)."""
    xm = x.astype(mm_dtype)
    h = lax.dot_general(xm, w1.astype(mm_dtype),
                        dimension_numbers=(((1,), (1,)), ((), ())),
                        preferred_element_type=jnp.float32) + b1
    h = jnp.maximum(h, 0.0)
    y = lax.dot_general(h.astype(mm_dtype), w2.astype(mm_dtype),
                        dimension_numbers=(((1,), (1,)), ((), ())),
                        preferred_element_type=jnp.float32) + b2
    return y


def _init_linear(key, out_features, in_features):
    # PyTorch nn.Linear default init: U(-1/sqrt(fan_in), 1/sqrt(fan_in))
    kw, kb = jax.random.split(key)
    bound = 1.0 / jnp.sqrt(jnp.float32(in_features))
    w = jax.random.uniform(kw, (out_features, in_features), jnp.float32,
                           minval=-bound, maxval=bound)
    b = jax.random.uniform(kb, (out_features,), jnp.float32,
                           minval=-bound, maxval=bound)
    return w, b


if __name__ == "__main__":
    key = jax.random.PRNGKey(0)
    k_x, k_enc, k_dec = jax.random.split(key, 3)

    batch = 8
    input_dim = 16    # stands in for X.shape[1]
    hidden_dim = 4    # module default

    x = jax.random.normal(k_x, (batch, input_dim), jnp.float32)
    w1, b1 = _init_linear(k_enc, hidden_dim, input_dim)   # encoder Linear
    w2, b2 = _init_linear(k_dec, input_dim, hidden_dim)   # decoder Linear

    # --- float32 matmul path (exact match to the PyTorch forward) ---
    params_f32 = prepare_params(w1, b1, w2, b2, mm_dtype=jnp.float32)
    out = jax.block_until_ready(autoencoder_forward(x, params_f32))
    ref = _reference_forward(x, w1, b1, w2, b2, mm_dtype=jnp.float32)
    assert out.shape == (batch, input_dim)
    assert jnp.allclose(out, ref, atol=1e-5, rtol=1e-5)

    # --- bf16 matmul-operand path (valid on v5e/v6e/v7x; f32 accumulate) ---
    params_bf16 = prepare_params(w1, b1, w2, b2, mm_dtype=jnp.bfloat16)
    x_bf16 = x.astype(jnp.bfloat16)
    out_bf16 = jax.block_until_ready(autoencoder_forward(x_bf16, params_bf16))
    ref_bf16 = _reference_forward(x, w1, b1, w2, b2, mm_dtype=jnp.bfloat16)
    assert jnp.allclose(out_bf16, ref_bf16, atol=1e-2, rtol=1e-2)

    print("KERNEL_OK")
</pallas_src>

<mosaic_0001>
module attributes {stable_mosaic.version = 11 : i64} {
  func.func @_autoencoder_kernel(%arg0: i32, %arg1: memref<8x16xf32, #tpu.memory_space<vmem>>, %arg2: memref<128x16xf32, #tpu.memory_space<vmem>>, %arg3: memref<1x128xf32, #tpu.memory_space<vmem>>, %arg4: memref<16x128xf32, #tpu.memory_space<vmem>>, %arg5: memref<1x16xf32, #tpu.memory_space<vmem>>, %arg6: memref<8x16xf32, #tpu.memory_space<vmem>>) attributes {dimension_semantics = [#tpu.dimension_semantics<parallel>], iteration_bounds = array<i64: 1>, scalar_prefetch = 0 : i64, scratch_operands = 0 : i64, tpu.core_type = #tpu.core_type<tc>, window_params = [{transform_indices = @transform_0, window_bounds = array<i64: 8, 16>}, {pipeline_mode = #tpu.pipeline_mode<synchronous>, transform_indices = @transform_1, window_bounds = array<i64: 128, 16>}, {pipeline_mode = #tpu.pipeline_mode<synchronous>, transform_indices = @transform_2, window_bounds = array<i64: 1, 128>}, {pipeline_mode = #tpu.pipeline_mode<synchronous>, transform_indices = @transform_3, window_bounds = array<i64: 16, 128>}, {pipeline_mode = #tpu.pipeline_mode<synchronous>, transform_indices = @transform_4, window_bounds = array<i64: 1, 16>}, {transform_indices = @transform_5, window_bounds = array<i64: 8, 16>}]} {
    %c0 = arith.constant 0 : index
    %c0_0 = arith.constant 0 : index
    %0 = vector.load %arg1[%c0, %c0_0] : memref<8x16xf32, #tpu.memory_space<vmem>>, vector<8x16xf32>
    %c0_1 = arith.constant 0 : index
    %c0_2 = arith.constant 0 : index
    %1 = vector.load %arg2[%c0_1, %c0_2] : memref<128x16xf32, #tpu.memory_space<vmem>>, vector<128x16xf32>
    %cst = arith.constant dense<0.000000e+00> : vector<8x128xf32>
    %2 = tpu.matmul %0, %1, %cst {dimension_numbers = #tpu.dot_dimension_numbers<[1], [1], [0], [0], [0, 0, 1, 0], [], []>} : vector<8x16xf32>, vector<128x16xf32>, vector<8x128xf32> -> vector<8x128xf32>
    %c0_3 = arith.constant 0 : index
    %c0_4 = arith.constant 0 : index
    %3 = vector.load %arg3[%c0_3, %c0_4] : memref<1x128xf32, #tpu.memory_space<vmem>>, vector<1x128xf32>
    %4 = vector.broadcast %3 : vector<1x128xf32> to vector<8x128xf32>
    %5 = arith.addf %2, %4 : vector<8x128xf32>
    %cst_5 = arith.constant 0.000000e+00 : f32
    %6 = vector.broadcast %cst_5 : f32 to vector<8x128xf32>
    %7 = arith.maximumf %5, %6 : vector<8x128xf32>
    %c0_6 = arith.constant 0 : index
    %c0_7 = arith.constant 0 : index
    %8 = vector.load %arg4[%c0_6, %c0_7] : memref<16x128xf32, #tpu.memory_space<vmem>>, vector<16x128xf32>
    %cst_8 = arith.constant dense<0.000000e+00> : vector<8x16xf32>
    %9 = tpu.matmul %7, %8, %cst_8 {dimension_numbers = #tpu.dot_dimension_numbers<[1], [1], [0], [0], [0, 0, 1, 0], [], []>} : vector<8x128xf32>, vector<16x128xf32>, vector<8x16xf32> -> vector<8x16xf32>
    %c0_9 = arith.constant 0 : index
    %c0_10 = arith.constant 0 : index
    %10 = vector.load %arg5[%c0_9, %c0_10] : memref<1x16xf32, #tpu.memory_space<vmem>>, vector<1x16xf32>
    %11 = vector.broadcast %10 : vector<1x16xf32> to vector<8x16xf32>
    %12 = arith.addf %9, %11 : vector<8x16xf32>
    %c0_11 = arith.constant 0 : index
    %c0_12 = arith.constant 0 : index
    %13 = vector.load %arg6[%c0_11, %c0_12] : memref<8x16xf32, #tpu.memory_space<vmem>>, vector<8x16xf32>
    tpu.vector_store %arg6[%c0_11, %c0_12], %12 {strides = array<i32>} : memref<8x16xf32, #tpu.memory_space<vmem>>, vector<8x16xf32>,
    return
  }
  func.func @transform_0(%arg0: i32) -> (i32, i32) {
    %c0_i32 = arith.constant 0 : i32
    %c0_i32_0 = arith.constant 0 : i32
    return %arg0, %c0_i32 : i32, i32
  }
  func.func @transform_1(%arg0: i32) -> (i32, i32) {
    %c0_i32 = arith.constant 0 : i32
    %c0_i32_0 = arith.constant 0 : i32
    %c0_i32_1 = arith.constant 0 : i32
    return %c0_i32, %c0_i32_0 : i32, i32
  }
  func.func @transform_2(%arg0: i32) -> (i32, i32) {
    %c0_i32 = arith.constant 0 : i32
    %c0_i32_0 = arith.constant 0 : i32
    %c0_i32_1 = arith.constant 0 : i32
    return %c0_i32, %c0_i32_0 : i32, i32
  }
  func.func @transform_3(%arg0: i32) -> (i32, i32) {
    %c0_i32 = arith.constant 0 : i32
    %c0_i32_0 = arith.constant 0 : i32
    %c0_i32_1 = arith.constant 0 : i32
    return %c0_i32, %c0_i32_0 : i32, i32
  }
  func.func @transform_4(%arg0: i32) -> (i32, i32) {
    %c0_i32 = arith.constant 0 : i32
    %c0_i32_0 = arith.constant 0 : i32
    %c0_i32_1 = arith.constant 0 : i32
    return %c0_i32, %c0_i32_0 : i32, i32
  }
  func.func @transform_5(%arg0: i32) -> (i32, i32) {
    %c0_i32 = arith.constant 0 : i32
    %c0_i32_0 = arith.constant 0 : i32
    return %arg0, %c0_i32 : i32, i32
  }
}

module attributes {stable_mosaic.version = 11 : i64} {
  func.func @_autoencoder_kernel(%arg0: i32, %arg1: memref<8x16xf32, #tpu.memory_space<vmem>>, %arg2: memref<128x16xf32, #tpu.memory_space<vmem>>, %arg3: memref<1x128xf32, #tpu.memory_space<vmem>>, %arg4: memref<16x128xf32, #tpu.memory_space<vmem>>, %arg5: memref<1x16xf32, #tpu.memory_space<vmem>>, %arg6: memref<8x16xf32, #tpu.memory_space<vmem>>) attributes {dimension_semantics = [#tpu.dimension_semantics<parallel>], iteration_bounds = array<i64: 1>, scalar_prefetch = 0 : i64, scratch_operands = 0 : i64, tpu.core_type = #tpu.core_type<tc>, window_params = [{transform_indices = @transform_0, window_bounds = array<i64: 8, 16>}, {pipeline_mode = #tpu.pipeline_mode<synchronous>, transform_indices = @transform_1, window_bounds = array<i64: 128, 16>}, {pipeline_mode = #tpu.pipeline_mode<synchronous>, transform_indices = @transform_2, window_bounds = array<i64: 1, 128>}, {pipeline_mode = #tpu.pipeline_mode<synchronous>, transform_indices = @transform_3, window_bounds = array<i64: 16, 128>}, {pipeline_mode = #tpu.pipeline_mode<synchronous>, transform_indices = @transform_4, window_bounds = array<i64: 1, 16>}, {transform_indices = @transform_5, window_bounds = array<i64: 8, 16>}]} {
    %c0 = arith.constant 0 : index
    %c0_0 = arith.constant 0 : index
    %0 = vector.load %arg1[%c0, %c0_0] : memref<8x16xf32, #tpu.memory_space<vmem>>, vector<8x16xf32>
    %c0_1 = arith.constant 0 : index
    %c0_2 = arith.constant 0 : index
    %1 = vector.load %arg2[%c0_1, %c0_2] : memref<128x16xf32, #tpu.memory_space<vmem>>, vector<128x16xf32>
    %cst = arith.constant dense<0.000000e+00> : vector<8x128xf32>
    %2 = tpu.matmul %0, %1, %cst {dimension_numbers = #tpu.dot_dimension_numbers<[1], [1], [0], [0], [0, 0, 1, 0], [], []>} : vector<8x16xf32>, vector<128x16xf32>, vector<8x128xf32> -> vector<8x128xf32>
    %c0_3 = arith.constant 0 : index
    %c0_4 = arith.constant 0 : index
    %3 = vector.load %arg3[%c0_3, %c0_4] : memref<1x128xf32, #tpu.memory_space<vmem>>, vector<1x128xf32>
    %4 = vector.broadcast %3 : vector<1x128xf32> to vector<8x128xf32>
    %5 = arith.addf %2, %4 : vector<8x128xf32>
    %cst_5 = arith.constant 0.000000e+00 : f32
    %6 = vector.broadcast %cst_5 : f32 to vector<8x128xf32>
    %7 = arith.maximumf %5, %6 : vector<8x128xf32>
    %c0_6 = arith.constant 0 : index
    %c0_7 = arith.constant 0 : index
    %8 = vector.load %arg4[%c0_6, %c0_7] : memref<16x128xf32, #tpu.memory_space<vmem>>, vector<16x128xf32>
    %cst_8 = arith.constant dense<0.000000e+00> : vector<8x16xf32>
    %9 = tpu.matmul %7, %8, %cst_8 {dimension_numbers = #tpu.dot_dimension_numbers<[1], [1], [0], [0], [0, 0, 1, 0], [], []>} : vector<8x128xf32>, vector<16x128xf32>, vector<8x16xf32> -> vector<8x16xf32>
    %c0_9 = arith.constant 0 : index
    %c0_10 = arith.constant 0 : index
    %10 = vector.load %arg5[%c0_9, %c0_10] : memref<1x16xf32, #tpu.memory_space<vmem>>, vector<1x16xf32>
    %11 = vector.broadcast %10 : vector<1x16xf32> to vector<8x16xf32>
    %12 = arith.addf %9, %11 : vector<8x16xf32>
    %c0_11 = arith.constant 0 : index
    %c0_12 = arith.constant 0 : index
    %13 = vector.load %arg6[%c0_11, %c0_12] : memref<8x16xf32, #tpu.memory_space<vmem>>, vector<8x16xf32>
    tpu.vector_store %arg6[%c0_11, %c0_12], %12 {strides = array<i32>} : memref<8x16xf32, #tpu.memory_space<vmem>>, vector<8x16xf32>,
    return
  }
  func.func @transform_0(%arg0: i32) -> (i32, i32) {
    %c0_i32 = arith.constant 0 : i32
    %c0_i32_0 = arith.constant 0 : i32
    return %arg0, %c0_i32 : i32, i32
  }
  func.func @transform_1(%arg0: i32) -> (i32, i32) {
    %c0_i32 = arith.constant 0 : i32
    %c0_i32_0 = arith.constant 0 : i32
    %c0_i32_1 = arith.constant 0 : i32
    return %c0_i32, %c0_i32_0 : i32, i32
  }
  func.func @transform_2(%arg0: i32) -> (i32, i32) {
    %c0_i32 = arith.constant 0 : i32
    %c0_i32_0 = arith.constant 0 : i32
    %c0_i32_1 = arith.constant 0 : i32
    return %c0_i32, %c0_i32_0 : i32, i32
  }
  func.func @transform_3(%arg0: i32) -> (i32, i32) {
    %c0_i32 = arith.constant 0 : i32
    %c0_i32_0 = arith.constant 0 : i32
    %c0_i32_1 = arith.constant 0 : i32
    return %c0_i32, %c0_i32_0 : i32, i32
  }
  func.func @transform_4(%arg0: i32) -> (i32, i32) {
    %c0_i32 = arith.constant 0 : i32
    %c0_i32_0 = arith.constant 0 : i32
    %c0_i32_1 = arith.constant 0 : i32
    return %c0_i32, %c0_i32_0 : i32, i32
  }
  func.func @transform_5(%arg0: i32) -> (i32, i32) {
    %c0_i32 = arith.constant 0 : i32
    %c0_i32_0 = arith.constant 0 : i32
    return %arg0, %c0_i32 : i32, i32
  }
}

</mosaic_0001>

<llo_original>
// kernel: tpu_custom_call.1
$region0: #{tpu_custom_call.1}
  #allocation0 [shape = 'u32[]', space=smem, size = 0x4, offset = 0x4, fixed_abs, tag = 'smem constant byte address 0x4 - core index']
  #allocation1 [shape = 'u32[144,128]{1,0:T(1,128)}', space=vmem, size = 0x12000, scoped, tag = 'internal scratch']
  %s0 = inlined_call_operand.vmem [shape: f32[8,16], index: 0, kind: input, shape index: {}]
  %s1 = inlined_call_operand.vmem [shape: f32[128,16], index: 1, kind: input, shape index: {}]
  %s2 = inlined_call_operand.vmem [shape: f32[1,128], index: 2, kind: input, shape index: {}]
  %s3 = inlined_call_operand.vmem [shape: f32[16,128], index: 3, kind: input, shape index: {}]
  %s4 = inlined_call_operand.vmem [shape: f32[1,16], index: 4, kind: input, shape index: {}]
  %s5 = inlined_call_operand.hbm [shape: f32[8,16], index: 5, kind: output, shape index: {}]
  %s6 = sld [smem:[#allocation0]]
  $region30: #{tpu_custom_call.1} parent=0
    _
  %s8 = ssub.s32 1, %s6
  %s9 = scalar_select 0, %s8, %s6
  $region1: #{tpu_custom_call.1} parent=0
    #allocation2 [shape = 'u8[4096]{0}', space=vmem, size = 0x1000, scoped, tag = 'output window, operand 0, single buffered']
    #allocation3 [shape = 's32[1]{0}', space=sflag, size = 0x4, scoped, tag = 'scoped memory for tpu_custom_call.1']
    %10 = vsyncpa [#allocation3], 0
    // Predicated region
    $region2: #{tpu_custom_call.1} parent=1 // pred_check
      _
    $region3: #{tpu_custom_call.1} parent=1 // pred_check_branch
      %12 = sbr.rel (0) target = $region5
    $region4: #{tpu_custom_call.1} parent=1 // pred_region
      _
    $region5: #{tpu_custom_call.1} parent=1 // pred_fallthru
      _
    // Predicated region
    $region6: #{tpu_custom_call.1} parent=1 // pred_check
      _
    $region7: #{tpu_custom_call.1} parent=1 // pred_check_branch
      %14 = sbr.rel (0) target = $region9
    $region8: #{tpu_custom_call.1} parent=1 // pred_region
      _
    $region9: #{tpu_custom_call.1} parent=1 // pred_fallthru
      _
    // Predicated region
    $region10: #{tpu_custom_call.1} parent=1 // pred_check
      _
    $region11: #{tpu_custom_call.1} parent=1 // pred_check_branch
      %16 = sbr.rel (0) target = $region13
    $region12: #{tpu_custom_call.1} parent=1 // pred_region
      _
    $region13: #{tpu_custom_call.1} parent=1 // pred_fallthru
      _
    // Predicated region
    $region14: #{tpu_custom_call.1} parent=1 // pred_check
      _
    $region15: #{tpu_custom_call.1} parent=1 // pred_check_branch
      %18 = sbr.rel (0) target = $region17
    $region16: #{tpu_custom_call.1} parent=1 // pred_region
      _
    $region17: #{tpu_custom_call.1} parent=1 // pred_fallthru
      _
    // Predicated region
    $region18: #{tpu_custom_call.1} parent=1 // pred_check
      _
    $region19: #{tpu_custom_call.1} parent=1 // pred_check_branch
      %20 = sbr.rel (0) target = $region21
    $region20: #{tpu_custom_call.1} parent=1 // pred_region
      _
    $region21: #{tpu_custom_call.1} parent=1 // pred_fallthru
      _
    %v21 = vld [vmem:[%s0] sm:$0xff]
    %v22 = vld [vmem:[%s1] sm:$0xff]
    %v23 = vld [vmem:[%s1 + $0x8] sm:$0xff]
    %v24 = vld [vmem:[%s1 + $0x10] sm:$0xff]
    %v25 = vld [vmem:[%s1 + $0x18] sm:$0xff]
    %v26 = vld [vmem:[%s1 + $0x20] sm:$0xff]
    %v27 = vld [vmem:[%s1 + $0x28] sm:$0xff]
    %v28 = vld [vmem:[%s1 + $0x30] sm:$0xff]
    %v29 = vld [vmem:[%s1 + $0x38] sm:$0xff]
    %v30 = vld [vmem:[%s1 + $0x40] sm:$0xff]
    %v31 = vld [vmem:[%s1 + $0x48] sm:$0xff]
    %v32 = vld [vmem:[%s1 + $0x50] sm:$0xff]
    %v33 = vld [vmem:[%s1 + $0x58] sm:$0xff]
    %v34 = vld [vmem:[%s1 + $0x60] sm:$0xff]
    %v35 = vld [vmem:[%s1 + $0x68] sm:$0xff]
    %v36 = vld [vmem:[%s1 + $0x70] sm:$0xff]
    %v37 = vld [vmem:[%s1 + $0x78] sm:$0xff]
    %v38 = vld [vmem:[%s2] sm:$0x1]
    %v40 = vlaneseq
    %v41 = vshrl.u32 %v40, 7
    %v42 = vsub.s32 0, %v41
    %v43 = vrot.slane %v38, %v42
    %vm45 = vcmask 130048
    %v47 = vsel %vm45, %v21, 0
    %v50 = vsel %vm45, %v22, 0
    %v53 = vsel %vm45, %v23, 0
    %v56 = vsel %vm45, %v24, 0
    %v59 = vsel %vm45, %v25, 0
    %v62 = vsel %vm45, %v26, 0
    %v65 = vsel %vm45, %v27, 0
    %v68 = vsel %vm45, %v28, 0
    %v71 = vsel %vm45, %v29, 0
    %v74 = vsel %vm45, %v30, 0
    %v77 = vsel %vm45, %v31, 0
    %v80 = vsel %vm45, %v32, 0
    %v83 = vsel %vm45, %v33, 0
    %v86 = vsel %vm45, %v34, 0
    %v89 = vsel %vm45, %v35, 0
    %v92 = vsel %vm45, %v36, 0
    %v95 = vsel %vm45, %v37, 0
    %97 = vmatprep.subr.mxu0 0.0
    %98 = vmatpush1.xpose.msra.mxu0 %v95
    %99 = vmatprep.subr.mxu0 0.0
    %100 = vmatpush1.xpose.msra.mxu0 %v92
    %101 = vmatprep.subr.mxu0 0.0
    %102 = vmatpush1.xpose.msra.mxu0 %v89
    %103 = vmatprep.subr.mxu0 0.0
    %104 = vmatpush1.xpose.msra.mxu0 %v86
    %105 = vmatprep.subr.mxu0 0.0
    %106 = vmatpush1.xpose.msra.mxu0 %v83
    %107 = vmatprep.subr.mxu0 0.0
    %108 = vmatpush1.xpose.msra.mxu0 %v80
    %109 = vmatprep.subr.mxu0 0.0
    %110 = vmatpush1.xpose.msra.mxu0 %v77
    %111 = vmatprep.subr.mxu0 0.0
    %112 = vmatpush1.xpose.msra.mxu0 %v74
    %113 = vmatprep.subr.mxu0 0.0
    %114 = vmatpush1.xpose.msra.mxu0 %v71
    %115 = vmatprep.subr.mxu0 0.0
    %116 = vmatpush1.xpose.msra.mxu0 %v68
    %117 = vmatprep.subr.mxu0 0.0
    %118 = vmatpush1.xpose.msra.mxu0 %v65
    %119 = vmatprep.subr.mxu0 0.0
    %120 = vmatpush1.xpose.msra.mxu0 %v62
    %121 = vmatprep.subr.mxu0 0.0
    %122 = vmatpush1.xpose.msra.mxu0 %v59
    %123 = vmatprep.subr.mxu0 0.0
    %124 = vmatpush1.xpose.msra.mxu0 %v56
    %125 = vmatprep.subr.mxu0 0.0
    %126 = vmatpush1.xpose.msra.mxu0 %v53
    %127 = vmatprep.subr.mxu0 0.0
    %128 = vmatpush1.xpose.msra.mxu0 %v50
    %129 = vmatprep.subr.mxu0 0.0
    %130 = vmatpush2.xpose.msra.mxu0 0.0
    %131 = vmatprep.subr.mxu0 0.0
    %132 = vmatpush2.xpose.msra.mxu0 0.0
    %133 = vmatprep.subr.mxu0 0.0
    %134 = vmatpush2.xpose.msra.mxu0 0.0
    %135 = vmatprep.subr.mxu0 0.0
    %136 = vmatpush2.xpose.msra.mxu0 0.0
    %137 = vmatprep.subr.mxu0 0.0
    %138 = vmatpush2.xpose.msra.mxu0 0.0
    %139 = vmatprep.subr.mxu0 0.0
    %140 = vmatpush2.xpose.msra.mxu0 0.0
    %141 = vmatprep.subr.mxu0 0.0
    %142 = vmatpush2.xpose.msra.mxu0 0.0
    %143 = vmatprep.subr.mxu0 0.0
    %144 = vmatpush2.xpose.msra.mxu0 0.0
    %145 = vmatprep.subr.mxu0 0.0
    %146 = vmatpush2.xpose.msra.mxu0 0.0
    %147 = vmatprep.subr.mxu0 0.0
    %148 = vmatpush2.xpose.msra.mxu0 0.0
    %149 = vmatprep.subr.mxu0 0.0
    %150 = vmatpush2.xpose.msra.mxu0 0.0
    %151 = vmatprep.subr.mxu0 0.0
    %152 = vmatpush2.xpose.msra.mxu0 0.0
    %153 = vmatprep.subr.mxu0 0.0
    %154 = vmatpush2.xpose.msra.mxu0 0.0
    %155 = vmatprep.subr.mxu0 0.0
    %156 = vmatpush2.xpose.msra.mxu0 0.0
    %157 = vmatprep.subr.mxu0 0.0
    %158 = vmatpush2.xpose.msra.mxu0 0.0
    %159 = vmatprep.subr.mxu0 0.0
    %160 = vmatpush2.xpose.msra.mxu0 0.0
    %161 = vmatprep.mubr.f32.mxu0 0.0
    %162 = vmatmul.mubr.f32.gmra.mxu0 %v47
    %v163 = vpop.f32.mrf.mxu0
    %v164 = vadd.f32 %v43, %v163
    %v165 = vpop.f32.mrf.mxu0
    %166 = vdwg.mxu0
    %v167 = vmax.f32 %v164, 0.0
    %v168 = vld [vmem:[%s3] sm:$0xff]
    %v169 = vld [vmem:[%s3 + $0x8] sm:$0xff]
    %v170 = vld [vmem:[%s4] sm:$0x1]
    %v172 = vlaneseq
    %v173 = vshrl.u32 %v172, 7
    %v174 = vsub.s32 0, %v173
    %v175 = vrot.slane %v170, %v174
    %177 = vmatprep.subr.mxu0 0.0
    %178 = vmatpush1.xpose.msra.mxu0 0.0
    %179 = vmatprep.subr.mxu0 0.0
    %180 = vmatpush1.xpose.msra.mxu0 0.0
    %181 = vmatprep.subr.mxu0 0.0
    %182 = vmatpush1.xpose.msra.mxu0 0.0
    %183 = vmatprep.subr.mxu0 0.0
    %184 = vmatpush1.xpose.msra.mxu0 0.0
    %185 = vmatprep.subr.mxu0 0.0
    %186 = vmatpush1.xpose.msra.mxu0 0.0
    %187 = vmatprep.subr.mxu0 0.0
    %188 = vmatpush1.xpose.msra.mxu0 0.0
    %189 = vmatprep.subr.mxu0 0.0
    %190 = vmatpush1.xpose.msra.mxu0 0.0
    %191 = vmatprep.subr.mxu0 0.0
    %192 = vmatpush1.xpose.msra.mxu0 0.0
    %193 = vmatprep.subr.mxu0 0.0
    %194 = vmatpush1.xpose.msra.mxu0 0.0
    %195 = vmatprep.subr.mxu0 0.0
    %196 = vmatpush1.xpose.msra.mxu0 0.0
    %197 = vmatprep.subr.mxu0 0.0
    %198 = vmatpush1.xpose.msra.mxu0 0.0
    %199 = vmatprep.subr.mxu0 0.0
    %200 = vmatpush1.xpose.msra.mxu0 0.0
    %201 = vmatprep.subr.mxu0 0.0
    %202 = vmatpush1.xpose.msra.mxu0 0.0
    %203 = vmatprep.subr.mxu0 0.0
    %204 = vmatpush1.xpose.msra.mxu0 0.0
    %205 = vmatprep.subr.mxu0 0.0
    %206 = vmatpush1.xpose.msra.mxu0 %v169
    %207 = vmatprep.subr.mxu0 0.0
    %208 = vmatpush1.xpose.msra.mxu0 %v168
    %209 = vmatprep.subr.mxu0 0.0
    %210 = vmatpush2.xpose.msra.mxu0 0.0
    %211 = vmatprep.subr.mxu0 0.0
    %212 = vmatpush2.xpose.msra.mxu0 0.0
    %213 = vmatprep.subr.mxu0 0.0
    %214 = vmatpush2.xpose.msra.mxu0 0.0
    %215 = vmatprep.subr.mxu0 0.0
    %216 = vmatpush2.xpose.msra.mxu0 0.0
    %217 = vmatprep.subr.mxu0 0.0
    %218 = vmatpush2.xpose.msra.mxu0 0.0
    %219 = vmatprep.subr.mxu0 0.0
    %220 = vmatpush2.xpose.msra.mxu0 0.0
    %221 = vmatprep.subr.mxu0 0.0
    %222 = vmatpush2.xpose.msra.mxu0 0.0
    %223 = vmatprep.subr.mxu0 0.0
    %224 = vmatpush2.xpose.msra.mxu0 0.0
    %225 = vmatprep.subr.mxu0 0.0
    %226 = vmatpush2.xpose.msra.mxu0 0.0
    %227 = vmatprep.subr.mxu0 0.0
    %228 = vmatpush2.xpose.msra.mxu0 0.0
    %229 = vmatprep.subr.mxu0 0.0
    %230 = vmatpush2.xpose.msra.mxu0 0.0
    %231 = vmatprep.subr.mxu0 0.0
    %232 = vmatpush2.xpose.msra.mxu0 0.0
    %233 = vmatprep.subr.mxu0 0.0
    %234 = vmatpush2.xpose.msra.mxu0 0.0
    %235 = vmatprep.subr.mxu0 0.0
    %236 = vmatpush2.xpose.msra.mxu0 0.0
    %237 = vmatprep.subr.mxu0 0.0
    %238 = vmatpush2.xpose.msra.mxu0 0.0
    %239 = vmatprep.subr.mxu0 0.0
    %240 = vmatpush2.xpose.msra.mxu0 0.0
    %241 = vmatprep.mubr.f32.mxu0 0.0
    %242 = vmatmul.mubr.f32.gmra.mxu0 %v167
    %v243 = vpop.f32.mrf.mxu0
    %v244 = vadd.f32 %v175, %v243
    %v245 = vpop.f32.mrf.mxu0
    %246 = vdwg.mxu0
    %247 = vst.msk [vmem:[#allocation2] sm:$0xff] %vm45, %v244
    // Predicated region
    $region22: #{tpu_custom_call.1} parent=1 // pred_check
      _
    $region23: #{tpu_custom_call.1} parent=1 // pred_check_branch
      %249 = sbr.rel (0) target = $region25
    $region24: #{tpu_custom_call.1} parent=1 // pred_region
      %s251 = ssub.s32 128, 128
      %252 = vsyncadd [#allocation3], %s251
      %s254 = sshll.u32 [#allocation2], 4
      %s255 = int_to_ptr.vmem [resolvable:$true] %s254
      %257 = dma.vmem_to_hbm [thread:$0]  %s255, 128, %s5, [#allocation3]
    $region25: #{tpu_custom_call.1} parent=1 // pred_fallthru
      _
    // Predicated region
    $region26: #{tpu_custom_call.1} parent=1 // pred_check
      _
    $region27: #{tpu_custom_call.1} parent=1 // pred_check_branch
      %259 = sbr.rel (0) target = $region29
    $region28: #{tpu_custom_call.1} parent=1 // pred_region
      %260 = dma.done [#allocation3], 128
    $region29: #{tpu_custom_call.1} parent=1 // pred_fallthru
      _
    %261 = vsyncpa [#allocation3], 1

// kernel: tpu_custom_call.1
$region0: #{tpu_custom_call.1}
  #allocation0 [shape = 'u32[]', space=smem, size = 0x4, offset = 0x4, fixed_abs, tag = 'smem constant byte address 0x4 - core index']
  #allocation1 [shape = 'u32[144,128]{1,0:T(1,128)}', space=vmem, size = 0x12000, scoped, tag = 'internal scratch']
  %s0 = inlined_call_operand.vmem [shape: f32[8,16], index: 0, kind: input, shape index: {}]
  %s1 = inlined_call_operand.vmem [shape: f32[128,16], index: 1, kind: input, shape index: {}]
  %s2 = inlined_call_operand.vmem [shape: f32[1,128], index: 2, kind: input, shape index: {}]
  %s3 = inlined_call_operand.vmem [shape: f32[16,128], index: 3, kind: input, shape index: {}]
  %s4 = inlined_call_operand.vmem [shape: f32[1,16], index: 4, kind: input, shape index: {}]
  %s5 = inlined_call_operand.hbm [shape: f32[8,16], index: 5, kind: output, shape index: {}]
  %s6 = sld [smem:[#allocation0]]
  $region30: #{tpu_custom_call.1} parent=0
    _
  %s8 = ssub.s32 1, %s6
  %s9 = scalar_select 0, %s8, %s6
  $region1: #{tpu_custom_call.1} parent=0
    #allocation2 [shape = 'u8[4096]{0}', space=vmem, size = 0x1000, scoped, tag = 'output window, operand 0, single buffered']
    #allocation3 [shape = 's32[1]{0}', space=sflag, size = 0x4, scoped, tag = 'scoped memory for tpu_custom_call.1']
    %10 = vsyncpa [#allocation3], 0
    // Predicated region
    $region2: #{tpu_custom_call.1} parent=1 // pred_check
      _
    $region3: #{tpu_custom_call.1} parent=1 // pred_check_branch
      %12 = sbr.rel (0) target = $region5
    $region4: #{tpu_custom_call.1} parent=1 // pred_region
      _
    $region5: #{tpu_custom_call.1} parent=1 // pred_fallthru
      _
    // Predicated region
    $region6: #{tpu_custom_call.1} parent=1 // pred_check
      _
    $region7: #{tpu_custom_call.1} parent=1 // pred_check_branch
      %14 = sbr.rel (0) target = $region9
    $region8: #{tpu_custom_call.1} parent=1 // pred_region
      _
    $region9: #{tpu_custom_call.1} parent=1 // pred_fallthru
      _
    // Predicated region
    $region10: #{tpu_custom_call.1} parent=1 // pred_check
      _
    $region11: #{tpu_custom_call.1} parent=1 // pred_check_branch
      %16 = sbr.rel (0) target = $region13
    $region12: #{tpu_custom_call.1} parent=1 // pred_region
      _
    $region13: #{tpu_custom_call.1} parent=1 // pred_fallthru
      _
    // Predicated region
    $region14: #{tpu_custom_call.1} parent=1 // pred_check
      _
    $region15: #{tpu_custom_call.1} parent=1 // pred_check_branch
      %18 = sbr.rel (0) target = $region17
    $region16: #{tpu_custom_call.1} parent=1 // pred_region
      _
    $region17: #{tpu_custom_call.1} parent=1 // pred_fallthru
      _
    // Predicated region
    $region18: #{tpu_custom_call.1} parent=1 // pred_check
      _
    $region19: #{tpu_custom_call.1} parent=1 // pred_check_branch
      %20 = sbr.rel (0) target = $region21
    $region20: #{tpu_custom_call.1} parent=1 // pred_region
      _
    $region21: #{tpu_custom_call.1} parent=1 // pred_fallthru
      _
    %v21 = vld [vmem:[%s0] sm:$0xff]
    %v22 = vld [vmem:[%s1] sm:$0xff]
    %v23 = vld [vmem:[%s1 + $0x8] sm:$0xff]
    %v24 = vld [vmem:[%s1 + $0x10] sm:$0xff]
    %v25 = vld [vmem:[%s1 + $0x18] sm:$0xff]
    %v26 = vld [vmem:[%s1 + $0x20] sm:$0xff]
    %v27 = vld [vmem:[%s1 + $0x28] sm:$0xff]
    %v28 = vld [vmem:[%s1 + $0x30] sm:$0xff]
    %v29 = vld [vmem:[%s1 + $0x38] sm:$0xff]
    %v30 = vld [vmem:[%s1 + $0x40] sm:$0xff]
    %v31 = vld [vmem:[%s1 + $0x48] sm:$0xff]
    %v32 = vld [vmem:[%s1 + $0x50] sm:$0xff]
    %v33 = vld [vmem:[%s1 + $0x58] sm:$0xff]
    %v34 = vld [vmem:[%s1 + $0x60] sm:$0xff]
    %v35 = vld [vmem:[%s1 + $0x68] sm:$0xff]
    %v36 = vld [vmem:[%s1 + $0x70] sm:$0xff]
    %v37 = vld [vmem:[%s1 + $0x78] sm:$0xff]
    %v38 = vld [vmem:[%s2] sm:$0x1]
    %v40 = vlaneseq
    %v41 = vshrl.u32 %v40, 7
    %v42 = vsub.s32 0, %v41
    %v43 = vrot.slane %v38, %v42
    %vm45 = vcmask 130048
    %v47 = vsel %vm45, %v21, 0
    %v50 = vsel %vm45, %v22, 0
    %v53 = vsel %vm45, %v23, 0
    %v56 = vsel %vm45, %v24, 0
    %v59 = vsel %vm45, %v25, 0
    %v62 = vsel %vm45, %v26, 0
    %v65 = vsel %vm45, %v27, 0
    %v68 = vsel %vm45, %v28, 0
    %v71 = vsel %vm45, %v29, 0
    %v74 = vsel %vm45, %v30, 0
    %v77 = vsel %vm45, %v31, 0
    %v80 = vsel %vm45, %v32, 0
    %v83 = vsel %vm45, %v33, 0
    %v86 = vsel %vm45, %v34, 0
    %v89 = vsel %vm45, %v35, 0
    %v92 = vsel %vm45, %v36, 0
    %v95 = vsel %vm45, %v37, 0
    %97 = vmatprep.subr.mxu0 0.0
    %98 = vmatpush1.xpose.msra.mxu0 %v95
    %99 = vmatprep.subr.mxu0 0.0
    %100 = vmatpush1.xpose.msra.mxu0 %v92
    %101 = vmatprep.subr.mxu0 0.0
    %102 = vmatpush1.xpose.msra.mxu0 %v89
    %103 = vmatprep.subr.mxu0 0.0
    %104 = vmatpush1.xpose.msra.mxu0 %v86
    %105 = vmatprep.subr.mxu0 0.0
    %106 = vmatpush1.xpose.msra.mxu0 %v83
    %107 = vmatprep.subr.mxu0 0.0
    %108 = vmatpush1.xpose.msra.mxu0 %v80
    %109 = vmatprep.subr.mxu0 0.0
    %110 = vmatpush1.xpose.msra.mxu0 %v77
    %111 = vmatprep.subr.mxu0 0.0
    %112 = vmatpush1.xpose.msra.mxu0 %v74
    %113 = vmatprep.subr.mxu0 0.0
    %114 = vmatpush1.xpose.msra.mxu0 %v71
    %115 = vmatprep.subr.mxu0 0.0
    %116 = vmatpush1.xpose.msra.mxu0 %v68
    %117 = vmatprep.subr.mxu0 0.0
    %118 = vmatpush1.xpose.msra.mxu0 %v65
    %119 = vmatprep.subr.mxu0 0.0
    %120 = vmatpush1.xpose.msra.mxu0 %v62
    %121 = vmatprep.subr.mxu0 0.0
    %122 = vmatpush1.xpose.msra.mxu0 %v59
    %123 = vmatprep.subr.mxu0 0.0
    %124 = vmatpush1.xpose.msra.mxu0 %v56
    %125 = vmatprep.subr.mxu0 0.0
    %126 = vmatpush1.xpose.msra.mxu0 %v53
    %127 = vmatprep.subr.mxu0 0.0
    %128 = vmatpush1.xpose.msra.mxu0 %v50
    %129 = vmatprep.subr.mxu0 0.0
    %130 = vmatpush2.xpose.msra.mxu0 0.0
    %131 = vmatprep.subr.mxu0 0.0
    %132 = vmatpush2.xpose.msra.mxu0 0.0
    %133 = vmatprep.subr.mxu0 0.0
    %134 = vmatpush2.xpose.msra.mxu0 0.0
    %135 = vmatprep.subr.mxu0 0.0
    %136 = vmatpush2.xpose.msra.mxu0 0.0
    %137 = vmatprep.subr.mxu0 0.0
    %138 = vmatpush2.xpose.msra.mxu0 0.0
    %139 = vmatprep.subr.mxu0 0.0
    %140 = vmatpush2.xpose.msra.mxu0 0.0
    %141 = vmatprep.subr.mxu0 0.0
    %142 = vmatpush2.xpose.msra.mxu0 0.0
    %143 = vmatprep.subr.mxu0 0.0
    %144 = vmatpush2.xpose.msra.mxu0 0.0
    %145 = vmatprep.subr.mxu0 0.0
    %146 = vmatpush2.xpose.msra.mxu0 0.0
    %147 = vmatprep.subr.mxu0 0.0
    %148 = vmatpush2.xpose.msra.mxu0 0.0
    %149 = vmatprep.subr.mxu0 0.0
    %150 = vmatpush2.xpose.msra.mxu0 0.0
    %151 = vmatprep.subr.mxu0 0.0
    %152 = vmatpush2.xpose.msra.mxu0 0.0
    %153 = vmatprep.subr.mxu0 0.0
    %154 = vmatpush2.xpose.msra.mxu0 0.0
    %155 = vmatprep.subr.mxu0 0.0
    %156 = vmatpush2.xpose.msra.mxu0 0.0
    %157 = vmatprep.subr.mxu0 0.0
    %158 = vmatpush2.xpose.msra.mxu0 0.0
    %159 = vmatprep.subr.mxu0 0.0
    %160 = vmatpush2.xpose.msra.mxu0 0.0
    %161 = vmatprep.mubr.f32.mxu0 0.0
    %162 = vmatmul.mubr.f32.gmra.mxu0 %v47
    %v163 = vpop.f32.mrf.mxu0
    %v164 = vadd.f32 %v43, %v163
    %v165 = vpop.f32.mrf.mxu0
    %166 = vdwg.mxu0
    %v167 = vmax.f32 %v164, 0.0
    %v168 = vld [vmem:[%s3] sm:$0xff]
    %v169 = vld [vmem:[%s3 + $0x8] sm:$0xff]
    %v170 = vld [vmem:[%s4] sm:$0x1]
    %v172 = vlaneseq
    %v173 = vshrl.u32 %v172, 7
    %v174 = vsub.s32 0, %v173
    %v175 = vrot.slane %v170, %v174
    %177 = vmatprep.subr.mxu0 0.0
    %178 = vmatpush1.xpose.msra.mxu0 0.0
    %179 = vmatprep.subr.mxu0 0.0
    %180 = vmatpush1.xpose.msra.mxu0 0.0
    %181 = vmatprep.subr.mxu0 0.0
    %182 = vmatpush1.xpose.msra.mxu0 0.0
    %183 = vmatprep.subr.mxu0 0.0
    %184 = vmatpush1.xpose.msra.mxu0 0.0
    %185 = vmatprep.subr.mxu0 0.0
    %186 = vmatpush1.xpose.msra.mxu0 0.0
    %187 = vmatprep.subr.mxu0 0.0
    %188 = vmatpush1.xpose.msra.mxu0 0.0
    %189 = vmatprep.subr.mxu0 0.0
    %190 = vmatpush1.xpose.msra.mxu0 0.0
    %191 = vmatprep.subr.mxu0 0.0
    %192 = vmatpush1.xpose.msra.mxu0 0.0
    %193 = vmatprep.subr.mxu0 0.0
    %194 = vmatpush1.xpose.msra.mxu0 0.0
    %195 = vmatprep.subr.mxu0 0.0
    %196 = vmatpush1.xpose.msra.mxu0 0.0
    %197 = vmatprep.subr.mxu0 0.0
    %198 = vmatpush1.xpose.msra.mxu0 0.0
    %199 = vmatprep.subr.mxu0 0.0
    %200 = vmatpush1.xpose.msra.mxu0 0.0
    %201 = vmatprep.subr.mxu0 0.0
    %202 = vmatpush1.xpose.msra.mxu0 0.0
    %203 = vmatprep.subr.mxu0 0.0
    %204 = vmatpush1.xpose.msra.mxu0 0.0
    %205 = vmatprep.subr.mxu0 0.0
    %206 = vmatpush1.xpose.msra.mxu0 %v169
    %207 = vmatprep.subr.mxu0 0.0
    %208 = vmatpush1.xpose.msra.mxu0 %v168
    %209 = vmatprep.subr.mxu0 0.0
    %210 = vmatpush2.xpose.msra.mxu0 0.0
    %211 = vmatprep.subr.mxu0 0.0
    %212 = vmatpush2.xpose.msra.mxu0 0.0
    %213 = vmatprep.subr.mxu0 0.0
    %214 = vmatpush2.xpose.msra.mxu0 0.0
    %215 = vmatprep.subr.mxu0 0.0
    %216 = vmatpush2.xpose.msra.mxu0 0.0
    %217 = vmatprep.subr.mxu0 0.0
    %218 = vmatpush2.xpose.msra.mxu0 0.0
    %219 = vmatprep.subr.mxu0 0.0
    %220 = vmatpush2.xpose.msra.mxu0 0.0
    %221 = vmatprep.subr.mxu0 0.0
    %222 = vmatpush2.xpose.msra.mxu0 0.0
    %223 = vmatprep.subr.mxu0 0.0
    %224 = vmatpush2.xpose.msra.mxu0 0.0
    %225 = vmatprep.subr.mxu0 0.0
    %226 = vmatpush2.xpose.msra.mxu0 0.0
    %227 = vmatprep.subr.mxu0 0.0
    %228 = vmatpush2.xpose.msra.mxu0 0.0
    %229 = vmatprep.subr.mxu0 0.0
    %230 = vmatpush2.xpose.msra.mxu0 0.0
    %231 = vmatprep.subr.mxu0 0.0
    %232 = vmatpush2.xpose.msra.mxu0 0.0
    %233 = vmatprep.subr.mxu0 0.0
    %234 = vmatpush2.xpose.msra.mxu0 0.0
    %235 = vmatprep.subr.mxu0 0.0
    %236 = vmatpush2.xpose.msra.mxu0 0.0
    %237 = vmatprep.subr.mxu0 0.0
    %238 = vmatpush2.xpose.msra.mxu0 0.0
    %239 = vmatprep.subr.mxu0 0.0
    %240 = vmatpush2.xpose.msra.mxu0 0.0
    %241 = vmatprep.mubr.f32.mxu0 0.0
    %242 = vmatmul.mubr.f32.gmra.mxu0 %v167
    %v243 = vpop.f32.mrf.mxu0
    %v244 = vadd.f32 %v175, %v243
    %v245 = vpop.f32.mrf.mxu0
    %246 = vdwg.mxu0
    %247 = vst.msk [vmem:[#allocation2] sm:$0xff] %vm45, %v244
    // Predicated region
    $region22: #{tpu_custom_call.1} parent=1 // pred_check
      _
    $region23: #{tpu_custom_call.1} parent=1 // pred_check_branch
      %249 = sbr.rel (0) target = $region25
    $region24: #{tpu_custom_call.1} parent=1 // pred_region
      %s251 = ssub.s32 128, 128
      %252 = vsyncadd [#allocation3], %s251
      %s254 = sshll.u32 [#allocation2], 4
      %s255 = int_to_ptr.vmem [resolvable:$true] %s254
      %257 = dma.vmem_to_hbm [thread:$0]  %s255, 128, %s5, [#allocation3]
    $region25: #{tpu_custom_call.1} parent=1 // pred_fallthru
      _
    // Predicated region
    $region26: #{tpu_custom_call.1} parent=1 // pred_check
      _
    $region27: #{tpu_custom_call.1} parent=1 // pred_check_branch
      %259 = sbr.rel (0) target = $region29
    $region28: #{tpu_custom_call.1} parent=1 // pred_region
      %260 = dma.done [#allocation3], 128
    $region29: #{tpu_custom_call.1} parent=1 // pred_fallthru
      _
    %261 = vsyncpa [#allocation3], 1

</llo_original>
